<compile_context>
chip_gen: v5e
topology: v5e:2x2
jax: 0.10.0
libtpu: 0.0.40
codegen_flags: <defaults>
</compile_context>

<pallas_src>
import numpy as np

import jax
import jax.numpy as jnp
from jax.experimental import pallas as pl
from jax.experimental.pallas import tpu as pltpu


_PTS_PER_ROW = 32                      # points packed per lane-dense row
_IN_W = 3 * _PTS_PER_ROW               # 96  input lanes per row
_OUT_W = 16 * _PTS_PER_ROW             # 512 output lanes per row


def _round_up(x, m):
    return ((x + m - 1) // m) * m


def _make_embed_consts(dtype):
    """Constant (96, 512) block-diagonal embedding matrix and (1, 512) bias.

    Point j of a row occupies input columns 3j..3j+2 and output columns
    16j..16j+15.  Entries are only +-1, so the matmul is exact in f32 and bf16.
    """
    w = np.zeros((_IN_W, _OUT_W), np.float32)
    b = np.zeros((1, _OUT_W), np.float32)
    for j in range(_PTS_PER_ROW):
        w[3 * j + 0, 16 * j + 13] = -1.0   # x -> -e_023
        w[3 * j + 1, 16 * j + 12] = 1.0    # y ->  e_013
        w[3 * j + 2, 16 * j + 11] = -1.0   # z -> -e_012
        b[0, 16 * j + 14] = 1.0            # homogeneous coordinate e_123
    return jnp.asarray(w, dtype), jnp.asarray(b, dtype)


def _embed_kernel(pos_ref, w_ref, b_ref, out_ref):
    """pos_ref: (TG, 96); w_ref: (96, 512); b_ref: (1, 512); out_ref: (TG, 512)."""
    out = jnp.dot(pos_ref[...], w_ref[...], preferred_element_type=jnp.float32)
    out = out + b_ref[...].astype(jnp.float32)
    out_ref[...] = out.astype(out_ref.dtype)


def _embed_point_jax(pos):
    """Plain-JAX embed_point for the <=31-point ragged tail / tiny inputs."""
    mv = jnp.zeros(pos.shape[:-1] + (16,), pos.dtype)
    mv = mv.at[..., 14].set(1.0)
    mv = mv.at[..., 13].set(-pos[..., 0])
    mv = mv.at[..., 12].set(pos[..., 1])
    mv = mv.at[..., 11].set(-pos[..., 2])
    return mv


def embedding_forward(pos, *, tile_g=4096, out_dtype=None):
    """pos: (..., 3) -> (..., 1, 16).

    tile_g = number of 32-point groups per grid step (32 * tile_g points).
    On v7x keep tile_g small enough that the grid has >= 2 steps so the
    "parallel" axis can shard across both TensorCores.
    """
    assert pos.shape[-1] == 3, "embed_point expects 3D coordinates in the last axis"
    batch_shape = pos.shape[:-1]
    out_dtype = pos.dtype if out_dtype is None else jnp.dtype(out_dtype)

    n = int(np.prod(batch_shape)) if len(batch_shape) > 0 else 1
    pos_flat = pos.reshape(n, 3)

    g_bulk = n // _PTS_PER_ROW            # full 32-point rows
    n_bulk = g_bulk * _PTS_PER_ROW

    parts = []
    if g_bulk > 0:
        # (n_bulk, 3) -> (g_bulk, 96): contiguous reshape, no copy in the common case.
        pos96 = pos_flat[:n_bulk].reshape(g_bulk, _IN_W)
        w, b = _make_embed_consts(pos.dtype)

        tg = min(tile_g, g_bulk)
        if tg < g_bulk:
            tg = max(8, (tg // 8) * 8)    # sublane-aligned when not the full array
        grid = pl.cdiv(g_bulk, tg)        # partial last block handled by Pallas

        # Raise the scoped-VMEM limit so big tiles fit (v5e default is 16 MiB).
        in_itemsize = pos.dtype.itemsize
        out_itemsize = out_dtype.itemsize
        tg8 = _round_up(tg, 8)
        vmem_bytes = (2 * (tg8 * 128 * in_itemsize + tg8 * _OUT_W * out_itemsize)
                      + (_IN_W * _OUT_W + _OUT_W) * in_itemsize * 2
                      + (4 << 20))
        vmem_limit = int(min(max(vmem_bytes, 32 << 20), 64 << 20))

        out_wide = pl.pallas_call(
            _embed_kernel,
            out_shape=jax.ShapeDtypeStruct((g_bulk, _OUT_W), out_dtype),
            grid_spec=pl.GridSpec(
                grid=(grid,),
                in_specs=[
                    pl.BlockSpec((tg, _IN_W), lambda i: (i, 0)),
                    pl.BlockSpec((_IN_W, _OUT_W), lambda i: (0, 0)),
                    pl.BlockSpec((1, _OUT_W), lambda i: (0, 0)),
                ],
                out_specs=pl.BlockSpec((tg, _OUT_W), lambda i: (i, 0)),
            ),
            compiler_params=pltpu.CompilerParams(
                dimension_semantics=("parallel",),
                vmem_limit_bytes=vmem_limit),
        )(pos96, w, b)
        parts.append(out_wide.reshape(n_bulk, 16))

    tail = n - n_bulk
    if tail > 0:
        parts.append(_embed_point_jax(pos_flat[n_bulk:]).astype(out_dtype))

    mv_flat = parts[0] if len(parts) == 1 else jnp.concatenate(parts, axis=0)
    mv = mv_flat.reshape(batch_shape + (16,))
    return mv[..., None, :]               # == torch .unsqueeze(-2)


def _reference_forward(pos):
    """Pure-JAX reference for correctness checking."""
    return _embed_point_jax(pos)[..., None, :]


if __name__ == "__main__":
    key = jax.random.PRNGKey(0)

    # Small deterministic example: n = 256 points -> 8 lane-dense rows, one tile.
    batch, num_points = 2, 128
    pos = jax.random.normal(key, (batch, num_points, 3), dtype=jnp.float32)
    out = jax.block_until_ready(embedding_forward(pos))
    ref = _reference_forward(pos)
    assert out.shape == (batch, num_points, 1, 16), out.shape
    assert jnp.allclose(out, ref, atol=1e-6), "mismatch vs reference (small)"

    # Ragged point count + multi-step grid with a partial last block:
    # n = 3000 -> 93 full rows (+24-point tail), tile_g=64 -> grid of 2 steps.
    pos2 = jax.random.normal(jax.random.PRNGKey(1), (3, 1000, 3), dtype=jnp.float32)
    out2 = jax.block_until_ready(embedding_forward(pos2, tile_g=64))
    assert out2.shape == (3, 1000, 1, 16), out2.shape
    assert jnp.allclose(out2, _reference_forward(pos2), atol=1e-6), "mismatch (ragged)"

    # Tiny input (n < 32) exercises the pure-JAX fallback path.
    pos3 = jax.random.normal(jax.random.PRNGKey(2), (2, 8, 3), dtype=jnp.float32)
    out3 = jax.block_until_ready(embedding_forward(pos3))
    assert jnp.allclose(out3, _reference_forward(pos3), atol=1e-6), "mismatch (tiny)"

    print("KERNEL_OK")
</pallas_src>

<mosaic_0001>
module attributes {stable_mosaic.version = 11 : i64} {
  func.func @_embed_kernel(%arg0: i32, %arg1: memref<8x96xf32, #tpu.memory_space<vmem>>, %arg2: memref<96x512xf32, #tpu.memory_space<vmem>>, %arg3: memref<1x512xf32, #tpu.memory_space<vmem>>, %arg4: memref<8x512xf32, #tpu.memory_space<vmem>>) attributes {dimension_semantics = [#tpu.dimension_semantics<parallel>], iteration_bounds = array<i64: 1>, scalar_prefetch = 0 : i64, scratch_operands = 0 : i64, tpu.core_type = #tpu.core_type<tc>, window_params = [{transform_indices = @transform_0, window_bounds = array<i64: 8, 96>}, {pipeline_mode = #tpu.pipeline_mode<synchronous>, transform_indices = @transform_1, window_bounds = array<i64: 96, 512>}, {pipeline_mode = #tpu.pipeline_mode<synchronous>, transform_indices = @transform_2, window_bounds = array<i64: 1, 512>}, {transform_indices = @transform_3, window_bounds = array<i64: 8, 512>}]} {
    %c0 = arith.constant 0 : index
    %c0_0 = arith.constant 0 : index
    %0 = vector.load %arg1[%c0, %c0_0] : memref<8x96xf32, #tpu.memory_space<vmem>>, vector<8x96xf32>
    %c0_1 = arith.constant 0 : index
    %c0_2 = arith.constant 0 : index
    %1 = vector.load %arg2[%c0_1, %c0_2] : memref<96x512xf32, #tpu.memory_space<vmem>>, vector<96x512xf32>
    %cst = arith.constant dense<0.000000e+00> : vector<8x512xf32>
    %2 = tpu.matmul %0, %1, %cst {dimension_numbers = #tpu.dot_dimension_numbers<[1], [0], [0], [1], [0, 0, 1, 1], [], []>} : vector<8x96xf32>, vector<96x512xf32>, vector<8x512xf32> -> vector<8x512xf32>
    %c0_3 = arith.constant 0 : index
    %c0_4 = arith.constant 0 : index
    %3 = vector.load %arg3[%c0_3, %c0_4] : memref<1x512xf32, #tpu.memory_space<vmem>>, vector<1x512xf32>
    %4 = vector.broadcast %3 : vector<1x512xf32> to vector<8x512xf32>
    %5 = arith.addf %2, %4 : vector<8x512xf32>
    %c0_5 = arith.constant 0 : index
    %c0_6 = arith.constant 0 : index
    %6 = vector.load %arg4[%c0_5, %c0_6] : memref<8x512xf32, #tpu.memory_space<vmem>>, vector<8x512xf32>
    tpu.vector_store %arg4[%c0_5, %c0_6], %5 {strides = array<i32>} : memref<8x512xf32, #tpu.memory_space<vmem>>, vector<8x512xf32>,
    return
  }
  func.func @transform_0(%arg0: i32) -> (i32, i32) {
    %c0_i32 = arith.constant 0 : i32
    %c0_i32_0 = arith.constant 0 : i32
    return %arg0, %c0_i32 : i32, i32
  }
  func.func @transform_1(%arg0: i32) -> (i32, i32) {
    %c0_i32 = arith.constant 0 : i32
    %c0_i32_0 = arith.constant 0 : i32
    %c0_i32_1 = arith.constant 0 : i32
    return %c0_i32, %c0_i32_0 : i32, i32
  }
  func.func @transform_2(%arg0: i32) -> (i32, i32) {
    %c0_i32 = arith.constant 0 : i32
    %c0_i32_0 = arith.constant 0 : i32
    %c0_i32_1 = arith.constant 0 : i32
    return %c0_i32, %c0_i32_0 : i32, i32
  }
  func.func @transform_3(%arg0: i32) -> (i32, i32) {
    %c0_i32 = arith.constant 0 : i32
    %c0_i32_0 = arith.constant 0 : i32
    return %arg0, %c0_i32 : i32, i32
  }
}

</mosaic_0001>

<llo_original>
// kernel: tpu_custom_call.1
$region0: #{tpu_custom_call.1}
  #allocation0 [shape = 'u32[]', space=smem, size = 0x4, offset = 0x4, fixed_abs, tag = 'smem constant byte address 0x4 - core index']
  #allocation1 [shape = 'u32[72,128]{1,0:T(1,128)}', space=vmem, size = 0x9000, scoped, tag = 'internal scratch']
  %s0 = inlined_call_operand.hbm [shape: f32[8,96], index: 0, kind: input, shape index: {}]
  %s1 = inlined_call_operand.hbm [shape: f32[96,512], index: 1, kind: input, shape index: {}]
  %s2 = inlined_call_operand.hbm [shape: f32[1,512], index: 2, kind: input, shape index: {}]
  %s3 = inlined_call_operand.hbm [shape: f32[8,512], index: 3, kind: output, shape index: {}]
  %s4 = sld [smem:[#allocation0]]
  $region34: #{tpu_custom_call.1} parent=0
    _
  %s6 = ssub.s32 1, %s4
  %s7 = scalar_select 0, %s6, %s4
  $region1: #{tpu_custom_call.1} parent=0
    #allocation2 [shape = 'u8[4096]{0}', space=vmem, size = 0x1000, scoped, tag = 'input window, operand 0, single buffered']
    #allocation3 [shape = 's32[1]{0}', space=sflag, size = 0x4, scoped, tag = 'scoped memory for tpu_custom_call.1']
    #allocation4 [shape = 's32[1]{0}', space=sflag, size = 0x4, scoped, tag = 'scoped memory for tpu_custom_call.1']
    #allocation5 [shape = 'u8[196608]{0}', space=vmem, size = 0x30000, scoped, tag = 'input window, operand 1, single buffered']
    #allocation6 [shape = 's32[1]{0}', space=sflag, size = 0x4, scoped, tag = 'scoped memory for tpu_custom_call.1']
    #allocation7 [shape = 'u8[2048]{0}', space=vmem, size = 0x800, scoped, tag = 'input window, operand 2, single buffered']
    #allocation8 [shape = 'u8[16384]{0}', space=vmem, size = 0x4000, scoped, tag = 'output window, operand 0, single buffered']
    %8 = vsyncpa [#allocation3], 0
    %9 = vsyncpa [#allocation6], 0
    %10 = vsyncpa [#allocation4], 0
    // Predicated region
    $region2: #{tpu_custom_call.1} parent=1 // pred_check
      _
    $region3: #{tpu_custom_call.1} parent=1 // pred_check_branch
      %12 = sbr.rel (0) target = $region5
    $region4: #{tpu_custom_call.1} parent=1 // pred_region
      %14 = vsyncadd [#allocation3], 0
      %s16 = sshll.u32 %s0, 4
      %s17 = int_to_ptr.hbm [resolvable:$true] %s16
      %s18 = sshll.u32 [#allocation2], 4
      %s19 = int_to_ptr.vmem [resolvable:$true] %s18
      %21 = dma.hbm_to_vmem [thread:$0]  %s17, 128, %s19, [#allocation3]
    $region5: #{tpu_custom_call.1} parent=1 // pred_fallthru
      _
    // Predicated region
    $region6: #{tpu_custom_call.1} parent=1 // pred_check
      _
    $region7: #{tpu_custom_call.1} parent=1 // pred_check_branch
      %23 = sbr.rel (0) target = $region9
    $region8: #{tpu_custom_call.1} parent=1 // pred_region
      %25 = vsyncadd [#allocation6], 0
      %s26 = sshll.u32 %s1, 4
      %s27 = int_to_ptr.hbm [resolvable:$true] %s26
      %s28 = sshll.u32 [#allocation5], 4
      %s29 = int_to_ptr.vmem [resolvable:$true] %s28
      %34 = dma.hbm_to_vmem [thread:$0]  %s27, 6144, %s29, [#allocation6], 512, 512, 32
    $region9: #{tpu_custom_call.1} parent=1 // pred_fallthru
      _
    // Predicated region
    $region10: #{tpu_custom_call.1} parent=1 // pred_check
      _
    $region11: #{tpu_custom_call.1} parent=1 // pred_check_branch
      %36 = sbr.rel (0) target = $region13
    $region12: #{tpu_custom_call.1} parent=1 // pred_region
      %38 = vsyncadd [#allocation6], 0
      %s40 = sshll.u32 %s2, 4
      %s41 = int_to_ptr.hbm [resolvable:$true] %s40
      %s42 = sshll.u32 [#allocation7], 4
      %s43 = int_to_ptr.vmem [resolvable:$true] %s42
      %45 = dma.hbm_to_vmem [thread:$0]  %s41, 64, %s43, [#allocation6]
    $region13: #{tpu_custom_call.1} parent=1 // pred_fallthru
      _
    // Predicated region
    $region14: #{tpu_custom_call.1} parent=1 // pred_check
      _
    $region15: #{tpu_custom_call.1} parent=1 // pred_check_branch
      %47 = sbr.rel (0) target = $region17
    $region16: #{tpu_custom_call.1} parent=1 // pred_region
      %49 = dma.done [#allocation3], 128
    $region17: #{tpu_custom_call.1} parent=1 // pred_fallthru
      _
    // Predicated region
    $region18: #{tpu_custom_call.1} parent=1 // pred_check
      _
    $region19: #{tpu_custom_call.1} parent=1 // pred_check_branch
      %51 = sbr.rel (0) target = $region21
    $region20: #{tpu_custom_call.1} parent=1 // pred_region
      %53 = dma.done [#allocation6], 6144
    $region21: #{tpu_custom_call.1} parent=1 // pred_fallthru
      _
    // Predicated region
    $region22: #{tpu_custom_call.1} parent=1 // pred_check
      _
    $region23: #{tpu_custom_call.1} parent=1 // pred_check_branch
      %55 = sbr.rel (0) target = $region25
    $region24: #{tpu_custom_call.1} parent=1 // pred_region
      %57 = dma.done [#allocation6], 64
    $region25: #{tpu_custom_call.1} parent=1 // pred_fallthru
      _
    %v58 = vld [vmem:[#allocation2] sm:$0xff]
    %v59 = vld [vmem:[#allocation5] sm:$0xff]
    %v60 = vld [vmem:[#allocation5 + $0x8] sm:$0xff]
    %v61 = vld [vmem:[#allocation5 + $0x10] sm:$0xff]
    %v62 = vld [vmem:[#allocation5 + $0x18] sm:$0xff]
    %v63 = vld [vmem:[#allocation5 + $0x20] sm:$0xff]
    %v64 = vld [vmem:[#allocation5 + $0x28] sm:$0xff]
    %v65 = vld [vmem:[#allocation5 + $0x30] sm:$0xff]
    %v66 = vld [vmem:[#allocation5 + $0x38] sm:$0xff]
    %v67 = vld [vmem:[#allocation5 + $0x40] sm:$0xff]
    %v68 = vld [vmem:[#allocation5 + $0x48] sm:$0xff]
    %v69 = vld [vmem:[#allocation5 + $0x50] sm:$0xff]
    %v70 = vld [vmem:[#allocation5 + $0x58] sm:$0xff]
    %v71 = vld [vmem:[#allocation5 + $0x60] sm:$0xff]
    %v72 = vld [vmem:[#allocation5 + $0x68] sm:$0xff]
    %v73 = vld [vmem:[#allocation5 + $0x70] sm:$0xff]
    %v74 = vld [vmem:[#allocation5 + $0x78] sm:$0xff]
    %v75 = vld [vmem:[#allocation5 + $0x80] sm:$0xff]
    %v76 = vld [vmem:[#allocation5 + $0x88] sm:$0xff]
    %v77 = vld [vmem:[#allocation5 + $0x90] sm:$0xff]
    %v78 = vld [vmem:[#allocation5 + $0x98] sm:$0xff]
    %v79 = vld [vmem:[#allocation5 + $0xa0] sm:$0xff]
    %v80 = vld [vmem:[#allocation5 + $0xa8] sm:$0xff]
    %v81 = vld [vmem:[#allocation5 + $0xb0] sm:$0xff]
    %v82 = vld [vmem:[#allocation5 + $0xb8] sm:$0xff]
    %v83 = vld [vmem:[#allocation5 + $0xc0] sm:$0xff]
    %v84 = vld [vmem:[#allocation5 + $0xc8] sm:$0xff]
    %v85 = vld [vmem:[#allocation5 + $0xd0] sm:$0xff]
    %v86 = vld [vmem:[#allocation5 + $0xd8] sm:$0xff]
    %v87 = vld [vmem:[#allocation5 + $0xe0] sm:$0xff]
    %v88 = vld [vmem:[#allocation5 + $0xe8] sm:$0xff]
    %v89 = vld [vmem:[#allocation5 + $0xf0] sm:$0xff]
    %v90 = vld [vmem:[#allocation5 + $0xf8] sm:$0xff]
    %v91 = vld [vmem:[#allocation5 + $0x100] sm:$0xff]
    %v92 = vld [vmem:[#allocation5 + $0x108] sm:$0xff]
    %v93 = vld [vmem:[#allocation5 + $0x110] sm:$0xff]
    %v94 = vld [vmem:[#allocation5 + $0x118] sm:$0xff]
    %v95 = vld [vmem:[#allocation5 + $0x120] sm:$0xff]
    %v96 = vld [vmem:[#allocation5 + $0x128] sm:$0xff]
    %v97 = vld [vmem:[#allocation5 + $0x130] sm:$0xff]
    %v98 = vld [vmem:[#allocation5 + $0x138] sm:$0xff]
    %v99 = vld [vmem:[#allocation5 + $0x140] sm:$0xff]
    %v100 = vld [vmem:[#allocation5 + $0x148] sm:$0xff]
    %v101 = vld [vmem:[#allocation5 + $0x150] sm:$0xff]
    %v102 = vld [vmem:[#allocation5 + $0x158] sm:$0xff]
    %v103 = vld [vmem:[#allocation5 + $0x160] sm:$0xff]
    %v104 = vld [vmem:[#allocation5 + $0x168] sm:$0xff]
    %v105 = vld [vmem:[#allocation5 + $0x170] sm:$0xff]
    %v106 = vld [vmem:[#allocation5 + $0x178] sm:$0xff]
    %v107 = vld [vmem:[#allocation7] sm:$0xf]
    %v109 = vperm.slane %v107, 0
    %v110 = vperm.slane %v107, 1
    %v111 = vperm.slane %v107, 2
    %v112 = vperm.slane %v107, 3
    %vm117 = vcmask 785408
    %v119 = vsel %vm117, %v58, 0
    %121 = vmatpush.msra.mxu0 0.0
    %122 = vmatpush.msra.mxu0 0.0
    %123 = vmatpush.msra.mxu0 0.0
    %124 = vmatpush.msra.mxu0 0.0
    %125 = vmatpush.msra.mxu0 %v103
    %126 = vmatpush.msra.mxu0 %v99
    %127 = vmatpush.msra.mxu0 %v95
    %128 = vmatpush.msra.mxu0 %v91
    %129 = vmatpush.msra.mxu0 %v87
    %130 = vmatpush.msra.mxu0 %v83
    %131 = vmatpush.msra.mxu0 %v79
    %132 = vmatpush.msra.mxu0 %v75
    %133 = vmatpush.msra.mxu0 %v71
    %134 = vmatpush.msra.mxu0 %v67
    %135 = vmatpush.msra.mxu0 %v63
    %136 = vmatpush.msra.mxu0 %v59
    %137 = vmatmul.f32.gmra.mxu0 %v119
    %v138 = vpop.f32.mrf.mxu0
    %v139 = vadd.f32 %v109, %v138
    %140 = vdwg.mxu0
    %141 = vmatpush.msra.mxu0 0.0
    %142 = vmatpush.msra.mxu0 0.0
    %143 = vmatpush.msra.mxu0 0.0
    %144 = vmatpush.msra.mxu0 0.0
    %145 = vmatpush.msra.mxu0 %v104
    %146 = vmatpush.msra.mxu0 %v100
    %147 = vmatpush.msra.mxu0 %v96
    %148 = vmatpush.msra.mxu0 %v92
    %149 = vmatpush.msra.mxu0 %v88
    %150 = vmatpush.msra.mxu0 %v84
    %151 = vmatpush.msra.mxu0 %v80
    %152 = vmatpush.msra.mxu0 %v76
    %153 = vmatpush.msra.mxu0 %v72
    %154 = vmatpush.msra.mxu0 %v68
    %155 = vmatpush.msra.mxu0 %v64
    %156 = vmatpush.msra.mxu0 %v60
    %157 = vmatmul.f32.gmra.mxu0 %v119
    %v158 = vpop.f32.mrf.mxu0
    %v159 = vadd.f32 %v110, %v158
    %160 = vdwg.mxu0
    %161 = vmatpush.msra.mxu0 0.0
    %162 = vmatpush.msra.mxu0 0.0
    %163 = vmatpush.msra.mxu0 0.0
    %164 = vmatpush.msra.mxu0 0.0
    %165 = vmatpush.msra.mxu0 %v105
    %166 = vmatpush.msra.mxu0 %v101
    %167 = vmatpush.msra.mxu0 %v97
    %168 = vmatpush.msra.mxu0 %v93
    %169 = vmatpush.msra.mxu0 %v89
    %170 = vmatpush.msra.mxu0 %v85
    %171 = vmatpush.msra.mxu0 %v81
    %172 = vmatpush.msra.mxu0 %v77
    %173 = vmatpush.msra.mxu0 %v73
    %174 = vmatpush.msra.mxu0 %v69
    %175 = vmatpush.msra.mxu0 %v65
    %176 = vmatpush.msra.mxu0 %v61
    %177 = vmatmul.f32.gmra.mxu0 %v119
    %v178 = vpop.f32.mrf.mxu0
    %v179 = vadd.f32 %v111, %v178
    %180 = vdwg.mxu0
    %181 = vmatpush.msra.mxu0 0.0
    %182 = vmatpush.msra.mxu0 0.0
    %183 = vmatpush.msra.mxu0 0.0
    %184 = vmatpush.msra.mxu0 0.0
    %185 = vmatpush.msra.mxu0 %v106
    %186 = vmatpush.msra.mxu0 %v102
    %187 = vmatpush.msra.mxu0 %v98
    %188 = vmatpush.msra.mxu0 %v94
    %189 = vmatpush.msra.mxu0 %v90
    %190 = vmatpush.msra.mxu0 %v86
    %191 = vmatpush.msra.mxu0 %v82
    %192 = vmatpush.msra.mxu0 %v78
    %193 = vmatpush.msra.mxu0 %v74
    %194 = vmatpush.msra.mxu0 %v70
    %195 = vmatpush.msra.mxu0 %v66
    %196 = vmatpush.msra.mxu0 %v62
    %197 = vmatmul.f32.gmra.mxu0 %v119
    %v198 = vpop.f32.mrf.mxu0
    %v199 = vadd.f32 %v112, %v198
    %200 = vdwg.mxu0
    %201 = vst [vmem:[#allocation8] sm:$0xff] %v139
    %202 = vst [vmem:[#allocation8 + $0x8] sm:$0xff] %v159
    %203 = vst [vmem:[#allocation8 + $0x10] sm:$0xff] %v179
    %204 = vst [vmem:[#allocation8 + $0x18] sm:$0xff] %v199
    // Predicated region
    $region26: #{tpu_custom_call.1} parent=1 // pred_check
      _
    $region27: #{tpu_custom_call.1} parent=1 // pred_check_branch
      %206 = sbr.rel (0) target = $region29
    $region28: #{tpu_custom_call.1} parent=1 // pred_region
      %208 = vsyncadd [#allocation4], 0
      %s210 = sshll.u32 [#allocation8], 4
      %s211 = int_to_ptr.vmem [resolvable:$true] %s210
      %s212 = sshll.u32 %s3, 4
      %s213 = int_to_ptr.hbm [resolvable:$true] %s212
      %215 = dma.vmem_to_hbm [thread:$0]  %s211, 512, %s213, [#allocation4]
    $region29: #{tpu_custom_call.1} parent=1 // pred_fallthru
      _
    // Predicated region
    $region30: #{tpu_custom_call.1} parent=1 // pred_check
      _
    $region31: #{tpu_custom_call.1} parent=1 // pred_check_branch
      %217 = sbr.rel (0) target = $region33
    $region32: #{tpu_custom_call.1} parent=1 // pred_region
      %219 = dma.done [#allocation4], 512
    $region33: #{tpu_custom_call.1} parent=1 // pred_fallthru
      _
    %220 = vsyncpa [#allocation3], 1
    %221 = vsyncpa [#allocation6], 1
    %222 = vsyncpa [#allocation4], 1

</llo_original>
